<compile_context>
chip_gen: v6e
topology: v6e:2x2x1
jax: 0.10.0
libtpu: 0.0.40
codegen_flags: <defaults>
</compile_context>

<pallas_src>
import functools

import jax
import jax.numpy as jnp
from jax.experimental import pallas as pl
from jax.experimental.pallas import tpu as pltpu

_EPS = 1e-7


def _vmem_budget():
    """Generation-aware VMEM budget: (scoped limit bytes, per-buffer cap bytes)."""
    try:
        cap = int(getattr(pltpu.get_tpu_info(), "vmem_capacity_bytes", 0))
    except Exception:
        cap = 0
    if cap <= 0:
        cap = 64 * 1024 * 1024          # conservative default (v7x per-TC VMEM)
    total = max(cap // 2, 16 * 1024 * 1024)   # ~32 MiB v7x, ~64 MiB v5e/v6e
    # in + out, double-buffered (4 live tiles) + ~20% headroom for the compiler.
    per_buf = total // 5
    return total, per_buf


def _choose_tiling(N, C, HW, itemsize, per_buf_bytes):
    """Pick a (Bn, C, T) block: full-C reduction in-tile, lane-dense spatial axis."""
    col_bytes = C * itemsize            # one spatial column across all channels
    row_bytes = col_bytes * HW          # one full batch element

    if row_bytes <= per_buf_bytes:
        # Full-HW block -> one contiguous HBM slab per batch element.
        t = HW
        # Pack batch rows so each grid step moves >= ~2 MiB (amortizes the
        # ~0.35 us per-step overhead), bounded by the per-buffer VMEM budget.
        target = 2 * 1024 * 1024
        bn = min(N,
                 max(1, per_buf_bytes // row_bytes),
                 max(1, -(-target // row_bytes)))
        # v7x megacore: keep >= 2 grid steps when N allows, so both TCs get work.
        if N >= 2:
            bn = min(bn, -(-N // 2))
        bn = max(bn, 1)
    else:
        # One batch row per step; tile HW into lane-dense multiples of 128.
        bn = 1
        t = (per_buf_bytes // col_bytes) // 128 * 128
        if t < 128:
            # TODO(synk): C so large that a single 128-lane column block exceeds
            # the VMEM budget; would need a channel-split (two-pass) reduction.
            t = HW
        t = min(t, HW)
    return bn, t


def _make_normalize_kernel(power: float, dtype, eps: float = _EPS):
    p = float(power)
    p_int = int(p) if p == int(p) else None
    inv_p = 1.0 / p
    low_precision = jnp.dtype(dtype).itemsize < 4

    def kernel(x_ref, o_ref):
        # Block: (Bn, C, T) — full channel extent, lane-dense spatial tile.
        x = x_ref[...]
        xf = x.astype(jnp.float32)                       # f32 accumulation

        if p == 2.0:
            s = jnp.sum(xf * xf, axis=1, keepdims=True)   # (Bn, 1, T) — VPU
            norm = jnp.sqrt(s)                            # one EUP op
        elif p_int is not None and 1 <= p_int <= 8:
            # VPU multiply chain — no full-tile exp/log, and matches torch's
            # signed result for integer p applied to negative inputs.
            acc = xf
            for _ in range(p_int - 1):
                acc = acc * xf
            s = jnp.sum(acc, axis=1, keepdims=True)
            norm = s ** inv_p
        else:
            # Genuinely non-integer p (mirrors torch x.pow(p) semantics).
            s = jnp.sum(xf ** p, axis=1, keepdims=True)
            norm = s ** inv_p

        d = norm + eps
        # Approx reciprocal (EUP slot, essentially free) on the small (Bn,1,T)
        # row + one Newton–Raphson step for ~full f32 precision, then a single
        # full-tile VPU multiply instead of a full-tile divide.
        inv = pl.reciprocal(d, approx=True)
        inv = inv * (2.0 - d * inv)

        if low_precision:
            # bf16/fp16: scale in the input dtype (halves vreg/store traffic).
            o_ref[...] = x * inv.astype(x.dtype)
        else:
            o_ref[...] = (xf * inv).astype(o_ref.dtype)

    return kernel


@functools.partial(jax.jit, static_argnames=("power",))
def normalize(x: jax.Array, power: float = 2.0) -> jax.Array:
    """Channel-wise L_p normalization of an NCHW tensor (matches the PyTorch module)."""
    N, C, H, W = x.shape
    HW = H * W
    x3 = x.reshape(N, C, HW)                 # metadata-only reshape
    itemsize = jnp.dtype(x.dtype).itemsize

    total_vmem, per_buf = _vmem_budget()
    bn, t = _choose_tiling(N, C, HW, itemsize, per_buf)

    # Ragged last blocks (bn ∤ N or t ∤ HW) are handled by Pallas masked
    # boundary stores; padded input lanes only feed masked-out columns since
    # the reduction is over C only -> no wrapper pad / slice needed.
    grid = (pl.cdiv(N, bn), pl.cdiv(HW, t))
    spec = pl.BlockSpec((bn, C, t), lambda i, j: (i, 0, j))

    out3 = pl.pallas_call(
        _make_normalize_kernel(power, x.dtype),
        out_shape=jax.ShapeDtypeStruct((N, C, HW), x.dtype),
        grid_spec=pltpu.PrefetchScalarGridSpec(
            num_scalar_prefetch=0,
            grid=grid,
            in_specs=[spec],
            out_specs=spec,
        ),
        compiler_params=pltpu.CompilerParams(
            # Both grid axes are independent (reduction is over C, inside the
            # block) -> shardable across v7x's two TensorCores.
            dimension_semantics=("parallel", "parallel"),
            vmem_limit_bytes=total_vmem,
        ),
    )(x3)

    return out3.reshape(N, C, H, W)


def _reference(x: jax.Array, power: float = 2.0) -> jax.Array:
    xf = x.astype(jnp.float32)
    norm = jnp.power(jnp.sum(jnp.power(xf, power), axis=1, keepdims=True), 1.0 / power)
    return (xf / (norm + _EPS)).astype(x.dtype)


if __name__ == "__main__":
    key = jax.random.PRNGKey(0)
    # Small NCHW input consistent with the module's forward (reduction over dim 1).
    x = jax.random.normal(key, (2, 4, 16, 16), dtype=jnp.float32)

    out = normalize(x, power=2.0)
    out = jax.block_until_ready(out)

    ref = _reference(x, power=2.0)
    assert out.shape == x.shape and out.dtype == x.dtype
    # approx-reciprocal + one Newton step -> near-f32 accuracy
    assert jnp.allclose(out, ref, atol=1e-5, rtol=1e-4), "mismatch vs reference"

    print("KERNEL_OK")
</pallas_src>

<mosaic_0001>
module attributes {stable_mosaic.version = 11 : i64} {
  func.func @kernel(%arg0: i32, %arg1: i32, %arg2: memref<1x4x256xf32, #tpu.memory_space<vmem>>, %arg3: memref<1x4x256xf32, #tpu.memory_space<vmem>>) attributes {dimension_semantics = [#tpu.dimension_semantics<parallel>, #tpu.dimension_semantics<parallel>], iteration_bounds = array<i64: 2, 1>, scalar_prefetch = 0 : i64, scratch_operands = 0 : i64, tpu.core_type = #tpu.core_type<tc>, window_params = [{transform_indices = @transform_0, window_bounds = array<i64: 1, 4, 256>}, {transform_indices = @transform_1, window_bounds = array<i64: 1, 4, 256>}]} {
    %c0 = arith.constant 0 : index
    %c0_0 = arith.constant 0 : index
    %c0_1 = arith.constant 0 : index
    %0 = vector.load %arg2[%c0, %c0_0, %c0_1] : memref<1x4x256xf32, #tpu.memory_space<vmem>>, vector<1x4x256xf32>
    %1 = arith.mulf %0, %0 : vector<1x4x256xf32>
    %cst = arith.constant dense<0.000000e+00> : vector<1x256xf32>
    %2 = vector.multi_reduction <add>, %1, %cst [1] : vector<1x4x256xf32> to vector<1x256xf32>
    %3 = vector.shape_cast %2 : vector<1x256xf32> to vector<1x1x256xf32>
    %4 = math.sqrt %3 : vector<1x1x256xf32>
    %cst_2 = arith.constant 1.000000e-07 : f32
    %5 = vector.broadcast %cst_2 : f32 to vector<1x1x256xf32>
    %6 = arith.addf %4, %5 : vector<1x1x256xf32>
    %7 = tpu.reciprocal %6 {approx = true} : vector<1x1x256xf32> -> vector<1x1x256xf32>
    %8 = arith.mulf %6, %7 : vector<1x1x256xf32>
    %cst_3 = arith.constant 2.000000e+00 : f32
    %9 = vector.broadcast %cst_3 : f32 to vector<1x1x256xf32>
    %10 = arith.subf %9, %8 : vector<1x1x256xf32>
    %11 = arith.mulf %7, %10 : vector<1x1x256xf32>
    %12 = vector.broadcast %11 : vector<1x1x256xf32> to vector<1x4x256xf32>
    %13 = arith.mulf %0, %12 : vector<1x4x256xf32>
    %c0_4 = arith.constant 0 : index
    %c0_5 = arith.constant 0 : index
    %c0_6 = arith.constant 0 : index
    %14 = vector.load %arg3[%c0_4, %c0_5, %c0_6] : memref<1x4x256xf32, #tpu.memory_space<vmem>>, vector<1x4x256xf32>
    tpu.vector_store %arg3[%c0_4, %c0_5, %c0_6], %13 {strides = array<i32>} : memref<1x4x256xf32, #tpu.memory_space<vmem>>, vector<1x4x256xf32>,
    return
  }
  func.func @transform_0(%arg0: i32, %arg1: i32) -> (i32, i32, i32) {
    %c0_i32 = arith.constant 0 : i32
    %c0_i32_0 = arith.constant 0 : i32
    return %arg0, %c0_i32, %arg1 : i32, i32, i32
  }
  func.func @transform_1(%arg0: i32, %arg1: i32) -> (i32, i32, i32) {
    %c0_i32 = arith.constant 0 : i32
    %c0_i32_0 = arith.constant 0 : i32
    return %arg0, %c0_i32, %arg1 : i32, i32, i32
  }
}

</mosaic_0001>

<llo_original>
// kernel: normalize.1
$region0: #{normalize.1}
  #allocation0 [shape = 'u32[]', space=smem, size = 0x4, offset = 0x4, fixed_abs, tag = 'smem constant byte address 0x4 - core index']
  #allocation1 [shape = 'u32[144,128]{1,0:T(1,128)}', space=vmem, size = 0x12000, scoped, tag = 'internal scratch']
  %s0 = inlined_call_operand.vmem [shape: f32[2,4,256], index: 0, kind: input, shape index: {}]
  %s1 = inlined_call_operand.vmem [shape: f32[2,4,256], index: 1, kind: output, shape index: {}]
  %s2 = sld [smem:[#allocation0]]
  $region37: #{normalize.1} parent=0
    _
  %s4 = ssub.s32 1, %s2
  %s5 = scalar_select 0, %s4, %s2
  loop: start=0, step=1, limit=4
  $region2: #{normalize.1} parent=0 // loop_pre_header
    _
  $region3: #{normalize.1} parent=0 // loop_header
    %s7 = sphi 0, %s11
    %p8 = scmp.ge.s32.totalorder %s7, 4
    %s14 = sphi 0, %s26
    %s15 = sphi 0, %s22
    %s16 = sphi 0, %s14
    %s17 = sphi 0, %s15
    %s18 = sphi 0, %s16
    %s19 = sphi 0, %s17
    %s31 = sphi 0, %s33
    %s34 = sphi 0, %s31
    %s35 = sphi 0, %s34
    %s51 = sphi 0, %s35
    %s59 = sphi 0, %s61
    %s62 = sphi 0, %s59
    %s63 = sphi 0, %s62
    %s79 = sphi 0, %s63
  $region4: #{normalize.1} parent=0 // loop_header_branch
    %10 = sbr.rel (%p8) target = $region8
  $region5: #{normalize.1} parent=0 // loop_body
    %s12 = ssub.s32 %s7, 1
    %s13 = ssub.s32 %s7, 2
    %s20 = sadd.s32 1, %s15
    %p21 = scmp.ge.s32.totalorder %s20, 1
    %s22 = scalar_select %p21, 0, %s20
    %s23 = sadd.s32 1, %s14
    %s24 = scalar_select %p21, %s23, %s14
    %p25 = scmp.ge.s32.totalorder %s24, 2
    %s26 = scalar_select %p25, 0, %s24
    %s27 = ssub.s32 %s14, %s26
    %s28 = ssub.s32 %s15, %s22
    %s29 = sor.u32 %s27, %s28
    %p30 = scmp.eq.s32.totalorder %s29, 0
    %s32 = sadd.s32 %s31, 1
    %s33 = scalar_select %p30, %s31, %s32
    %p36 = pneg %p30
    %p37 = scmp.eq.s32.totalorder %s7, 1
    %p38 = por %p36, %p37
    %p39 = scmp.ne.s32.totalorder %s31, %s34
    %p40 = scmp.eq.s32.totalorder %s7, 0
    %p41 = por %p39, %p40
    %p42 = scmp.ne.s32.totalorder %s31, %s34
    %p43 = scmp.eq.s32.totalorder %s12, 1
    %p44 = por %p42, %p43
    %p45 = scmp.ne.s32.totalorder %s34, %s35
    %p46 = scmp.eq.s32.totalorder %s12, 0
    %p47 = por %p45, %p46
    %p48 = scmp.ne.s32.totalorder %s34, %s35
    %p49 = scmp.eq.s32.totalorder %s13, 1
    %p50 = por %p48, %p49
    %p52 = scmp.ne.s32.totalorder %s35, %s51
    %p53 = scmp.eq.s32.totalorder %s13, 0
    %p54 = por %p52, %p53
    %s55 = ssub.s32 %s14, %s26
    %s56 = ssub.s32 %s15, %s22
    %s57 = sor.u32 %s55, %s56
    %p58 = scmp.eq.s32.totalorder %s57, 0
    %s60 = sadd.s32 %s59, 1
    %s61 = scalar_select %p58, %s59, %s60
    %p64 = pneg %p58
    %p65 = scmp.eq.s32.totalorder %s7, 1
    %p66 = por %p64, %p65
    %p67 = scmp.ne.s32.totalorder %s59, %s62
    %p68 = scmp.eq.s32.totalorder %s7, 0
    %p69 = por %p67, %p68
    %p70 = scmp.ne.s32.totalorder %s59, %s62
    %p71 = scmp.eq.s32.totalorder %s12, 1
    %p72 = por %p70, %p71
    %p73 = scmp.ne.s32.totalorder %s62, %s63
    %p74 = scmp.eq.s32.totalorder %s12, 0
    %p75 = por %p73, %p74
    %p76 = scmp.ne.s32.totalorder %s62, %s63
    %p77 = scmp.eq.s32.totalorder %s13, 1
    %p78 = por %p76, %p77
    %p80 = scmp.ne.s32.totalorder %s63, %s79
    %p81 = scmp.eq.s32.totalorder %s13, 0
    %p82 = por %p80, %p81
    %p83 = scmp.le.s32.totalorder 1, %s7
    %p84 = scmp.lt.s32.totalorder %s7, 3
    %p85 = pnand %p83, %p84
    %p86 = pneg %p85
    // Predicated region
    $region9: #{normalize.1} parent=5 // pred_check
      _
    $region10: #{normalize.1} parent=5 // pred_check_branch
      %88 = sbr.rel (%p85) target = $region12
    $region11: #{normalize.1} parent=5 // pred_region
      %s89 = ssub.s32 %s7, 1
    $region12: #{normalize.1} parent=5 // pred_fallthru
      _
    %p90 = scmp.lt.s32.totalorder %s7, 2
    // Predicated region
    $region13: #{normalize.1} parent=5 // pred_check
      %p91 = pneg %p90
    $region14: #{normalize.1} parent=5 // pred_check_branch
      %93 = sbr.rel (%p91) target = $region16
    $region15: #{normalize.1} parent=5 // pred_region
      // Predicated region
      $region17: #{normalize.1} parent=15 // pred_check
        %p94 = pneg %p41
      $region18: #{normalize.1} parent=15 // pred_check_branch
        %96 = sbr.rel (%p94) target = $region20
      $region19: #{normalize.1} parent=15 // pred_region
        %s97 = smul.u32 2, %s15
        %p98 = scmp.lt.s32.totalorder %s14, 1
        %s99 = scalar_select %p98, %s14, 1
        %p100 = scmp.lt.s32.totalorder %s97, 1
        %s101 = scalar_select %p100, %s97, 1
        %s102 = smul.addr %s99, 2
        %s103 = sadd.s32 %s101, %s102
        %s104 = smul.addr %s103, 4
        %s105 = scalar_lea.vmem %s0, %s104
        %s106 = smul.u32 2, %s15
      $region20: #{normalize.1} parent=15 // pred_fallthru
        _
    $region16: #{normalize.1} parent=5 // pred_fallthru
      _
    %p107 = scmp.le.s32.totalorder 1, %s7
    %p108 = scmp.lt.s32.totalorder %s7, 3
    %p109 = pnand %p107, %p108
    %p110 = pneg %p109
    // Predicated region
    $region21: #{normalize.1} parent=5 // pred_check
      _
    $region22: #{normalize.1} parent=5 // pred_check_branch
      %112 = sbr.rel (%p109) target = $region24
    $region23: #{normalize.1} parent=5 // pred_region
      %s113 = ssub.s32 %s7, 1
      %s114 = smul.u32 2, %s17
      %p115 = scmp.lt.s32.totalorder %s16, 1
      %s116 = scalar_select %p115, %s16, 1
      %p117 = scmp.lt.s32.totalorder %s114, 1
      %s118 = scalar_select %p117, %s114, 1
      %s119 = smul.addr %s116, 2
      %s120 = sadd.s32 %s118, %s119
      %s121 = smul.addr %s120, 4
      %s122 = scalar_lea.vmem %s0, %s121
      %p123 = pneg %p47
      %p124 = pneg %p44
      %p125 = pneg %p75
      %p126 = pneg %p72
      %s127 = smul.u32 2, %s17
      %p128 = scmp.lt.s32.totalorder %s16, 1
      %s129 = scalar_select %p128, %s16, 1
      %p130 = scmp.lt.s32.totalorder %s127, 1
      %s131 = scalar_select %p130, %s127, 1
      %s132 = smul.addr %s129, 2
      %s133 = sadd.s32 %s131, %s132
      %s134 = smul.addr %s133, 4
      %s135 = scalar_lea.vmem %s1, %s134
      %s136 = smul.u32 2, %s17
      %p137 = scmp.lt.s32.totalorder %s16, 1
      %s138 = scalar_select %p137, %s16, 1
      %p139 = scmp.lt.s32.totalorder %s136, 1
      %s140 = scalar_select %p139, %s136, 1
      %s141 = smul.addr %s138, 2
      %s142 = sadd.s32 %s140, %s141
      %s143 = smul.addr %s142, 4
      %s144 = scalar_lea.vmem %s0, %s143
      %s145 = smul.u32 2, %s17
      %s146 = smul.u32 2, %s17
      %p147 = scmp.lt.s32.totalorder %s16, 1
      %s148 = scalar_select %p147, %s16, 1
      %p149 = scmp.lt.s32.totalorder %s146, 1
      %s150 = scalar_select %p149, %s146, 1
      %s151 = smul.addr %s148, 2
      %s152 = sadd.s32 %s150, %s151
      %s153 = smul.addr %s152, 4
      %s154 = scalar_lea.vmem %s1, %s153
      %s155 = smul.u32 2, %s17
      %v156 = vld [vmem:[%s144] sm:$0xff]
      %v157 = vmul.f32 %v156, %v156
      %v159 = vcombine.high %v157, %v157
      %vm161 = vcmask 1043456
      %v162 = vsel %vm161, %v157, 0.0
      %v163 = vrot.slane %v162, 4
      %v164 = vadd.f32 %v162, %v163
      %v165 = vrot.slane %v164, 2
      %v166 = vadd.f32 %v164, %v165
      %v167 = vrot.slane %v166, 1
      %v168 = vadd.f32 %v166, %v167
      %v169 = vsel %vm161, %v159, 0.0
      %v170 = vrot.slane %v169, 4
      %v171 = vadd.f32 %v169, %v170
      %v172 = vrot.slane %v171, 2
      %v173 = vadd.f32 %v171, %v172
      %v174 = vrot.slane %v173, 1
      %v175 = vadd.f32 %v173, %v174
      %v176 = vrsqrt.pop %v168
      %v177 = vmul.f32 %v168, %v176
      %vm178 = vcmp.eq.f32.partialorder %v168, inf
      %v179 = vsel %vm178, %v168, %v177
      %vm180 = vcmp.eq.f32.partialorder %v168, 0.0
      %v181 = vand.u32 %v168, 2147483648
      %v182 = vsel %vm180, %v181, %v179
      %v183 = vrsqrt.pop %v175
      %v184 = vmul.f32 %v175, %v183
      %vm185 = vcmp.eq.f32.partialorder %v175, inf
      %v186 = vsel %vm185, %v175, %v184
      %vm187 = vcmp.eq.f32.partialorder %v175, 0.0
      %v188 = vand.u32 %v175, 2147483648
      %v189 = vsel %vm187, %v188, %v186
      %v190 = vadd.f32 %v182, 1e-07
      %v191 = vadd.f32 %v189, 1e-07
      %v192 = vrcp.pop %v190
      %v193 = vrcp.pop %v191
      %v194 = vmul.f32 %v190, %v192
      %v195 = vmul.f32 %v191, %v193
      %v196 = vsub.f32 2.0, %v194
      %v197 = vsub.f32 2.0, %v195
      %v198 = vmul.f32 %v192, %v196
      %v199 = vmul.f32 %v193, %v197
      %v202 = vcombine.low %v198, %v199
      %v204 = vmul.f32 %v156, %v202
      %205 = vst [vmem:[%s154] sm:$0xff] %v204
      %s206 = smul.u32 2, %s17
      %p207 = scmp.lt.s32.totalorder %s16, 1
      %s208 = scalar_select %p207, %s16, 1
      %p209 = scmp.lt.s32.totalorder %s206, 1
      %s210 = scalar_select %p209, %s206, 1
      %s211 = smul.addr %s208, 2
      %s212 = sadd.s32 %s210, %s211
      %s213 = smul.addr %s212, 4
      %s214 = scalar_lea.vmem %s1, %s213
      // Predicated region
      $region25: #{normalize.1} parent=23 // pred_check
        %p215 = pneg %p72
      $region26: #{normalize.1} parent=23 // pred_check_branch
        %217 = sbr.rel (%p215) target = $region28
      $region27: #{normalize.1} parent=23 // pred_region
        %s218 = smul.u32 2, %s17
      $region28: #{normalize.1} parent=23 // pred_fallthru
        _
    $region24: #{normalize.1} parent=5 // pred_fallthru
      _
    %p219 = scmp.le.s32.totalorder 2, %s7
    // Predicated region
    $region29: #{normalize.1} parent=5 // pred_check
      %p220 = pneg %p219
    $region30: #{normalize.1} parent=5 // pred_check_branch
      %222 = sbr.rel (%p220) target = $region32
    $region31: #{normalize.1} parent=5 // pred_region
      %s223 = ssub.s32 %s7, 2
      // Predicated region
      $region33: #{normalize.1} parent=31 // pred_check
        %p224 = pneg %p78
      $region34: #{normalize.1} parent=31 // pred_check_branch
        %226 = sbr.rel (%p224) target = $region36
      $region35: #{normalize.1} parent=31 // pred_region
        %s227 = smul.u32 2, %s19
        %p228 = scmp.lt.s32.totalorder %s18, 1
        %s229 = scalar_select %p228, %s18, 1
        %p230 = scmp.lt.s32.totalorder %s227, 1
        %s231 = scalar_select %p230, %s227, 1
        %s232 = smul.addr %s229, 2
        %s233 = sadd.s32 %s231, %s232
        %s234 = smul.addr %s233, 4
        %s235 = scalar_lea.vmem %s1, %s234
      $region36: #{normalize.1} parent=31 // pred_fallthru
        _
    $region32: #{normalize.1} parent=5 // pred_fallthru
      _
  $region6: #{normalize.1} parent=0 // loop_footer
    %s11 = sadd.s32 1, %s7
  $region7: #{normalize.1} parent=0 // loop_footer_branch
    %6 = sbr.rel target = $region3
  $region8: #{normalize.1} parent=0 // loop_exit
    _

</llo_original>
